<compile_context>
chip_gen: v6e
topology: v6e:2x2x1
jax: 0.10.0
libtpu: 0.0.40
codegen_flags: <defaults>
</compile_context>

<pallas_src>
import jax
import jax.numpy as jnp
from jax.experimental import pallas as pl
from jax.experimental.pallas import tpu as pltpu


# NF3 thresholds / levels (from the PyTorch reference).
_T0 = 0.8114928305149078
_T1 = 0.5024898052215576
_T2 = 0.2826657369732857
_T3 = 0.0916687622666359
_T4 = -0.1234657019376755
_T5 = -0.39097706973552704
_T6 = -0.7675113677978516

_L_P1 = 1.0
_L_P2 = 0.6229856610298157
_L_P3 = 0.3819939494132996
_L_P4 = 0.1833375245332718
_L_Z = 0.0
_L_N1 = -0.246931403875351
_L_N2 = -0.5350227355957031
_L_N3 = -1.0


def _round_nf3(qn):
    # Bucketize with a nested compare/select chain (VPU only).  Equivalent to
    # the reference's sequential where-chain (every assigned level stays in
    # the interval that selected it) at roughly half the VALU work.  The extra
    # innermost `qn < _T6` branch keeps NaN as NaN (all NaN compares are
    # False), matching the reference exactly for all-zero groups (0/0 = NaN).
    return jnp.where(qn >= _T0, _L_P1,
           jnp.where(qn >= _T1, _L_P2,
           jnp.where(qn >= _T2, _L_P3,
           jnp.where(qn >= _T3, _L_P4,
           jnp.where(qn >= _T4, _L_Z,
           jnp.where(qn >= _T5, _L_N1,
           jnp.where(qn >= _T6, _L_N2,
           jnp.where(qn < _T6, _L_N3, qn))))))))


def _nf3_quant_kernel(x_ref, o_ref):
    x = x_ref[...].astype(jnp.float32)                    # (TR, GROUP)
    # Fused per-row abs-max: one XLU lane reduction.
    scale = jnp.max(jnp.abs(x), axis=1, keepdims=True)    # (TR, 1)
    # Exact reciprocal on the narrow scale column, then one vmul/element
    # instead of a full-tile divide.  scale == 0 (all-zero group) makes qn a
    # NaN, which _round_nf3 propagates -> NaN output, same as the reference.
    # Known deviation: reciprocal-then-multiply can differ from an exact
    # divide by ~1 ulp, which may flip the bucket of a value sitting exactly
    # on an NF3 threshold.
    inv = pl.reciprocal(scale)
    qn = x * inv
    o_ref[...] = (_round_nf3(qn) * scale).astype(o_ref.dtype)


def _cdiv(a, b):
    return -(-a // b)


def _round_up(a, b):
    return _cdiv(a, b) * b


def ste_nf3_quantize(x, bit=3, q_group_size=128, tile_rows=4096):
    """Forward pass of SteNF3Quantizer as a Pallas TPU kernel."""
    del bit  # unused in the forward computation (kept for signature parity)
    # TODO(synk): straight-through-estimator backward (round_pass) is an
    # autograd concern; only the forward pass is implemented here.
    org_shape = x.shape
    if q_group_size > 0:
        assert org_shape[-1] % q_group_size == 0
        group = q_group_size
    elif q_group_size == -1:
        group = org_shape[-1]
    else:
        raise ValueError("q_group_size must be > 0 or == -1")
    # NOTE: group % 128 != 0 still compiles (block last dim == full array dim)
    # but loses lane-dense stores (vst.msk); 128-multiples are the fast path.

    qx = x.reshape(-1, group)
    rows = qx.shape[0]

    # Sublane granularity depends on dtype packing (f32: 8, bf16: 16, i8: 32).
    itemsize = x.dtype.itemsize
    gran = {4: 8, 2: 16, 1: 32}.get(itemsize, 8)

    # Per-row pipeline footprint: 2 double-buffered input + 2 output blocks
    # (itemsize each) + ~1 f32 temporary when the in-kernel cast is real.
    f32_temp = 0 if itemsize == 4 else 4
    bytes_per_row = group * (4 * itemsize + f32_temp)

    # VMEM budget derived from the chip (v7x: 64 MiB/TC, v5e/v6e: 128 MiB);
    # keep the pipeline within ~1/4 of physical VMEM for Mosaic headroom.
    try:
        phys_vmem = int(pltpu.get_tpu_info().vmem_capacity_bytes)
    except Exception:  # tracing off-device etc. -> assume smallest (v7x/TC).
        phys_vmem = 64 * 1024 * 1024
    budget = phys_vmem // 4
    max_tr_vmem = max(gran, budget // bytes_per_row)

    tr = max(gran, min(tile_rows, max_tr_vmem, _round_up(rows, gran)))
    tr = (tr // gran) * gran
    steps = _cdiv(rows, tr)

    # Prefer an even number of grid steps >= 2 so the "parallel" grid axis
    # shards evenly across v7x's two TensorCores.  On single-TC v5e/v6e the
    # extra grid step costs ~0.35 us, negligible for this mem-bound kernel.
    if rows >= 2 * gran and (steps < 2 or steps % 2 == 1):
        target = max(2, steps + (steps % 2))
        tr = max(gran, _round_up(_cdiv(rows, target), gran))
        steps = _cdiv(rows, tr)

    out = pl.pallas_call(
        _nf3_quant_kernel,
        out_shape=jax.ShapeDtypeStruct((rows, group), x.dtype),
        grid_spec=pltpu.PrefetchScalarGridSpec(
            num_scalar_prefetch=0,
            grid=(steps,),
            in_specs=[pl.BlockSpec((tr, group), lambda i: (i, 0))],
            out_specs=pl.BlockSpec((tr, group), lambda i: (i, 0)),
        ),
        compiler_params=pltpu.CompilerParams(
            dimension_semantics=("parallel",),
            vmem_limit_bytes=int(phys_vmem // 2),
        ),
    )(qx)

    return out.reshape(org_shape)


def _reference_jax(x, q_group_size=128):
    """Faithful (divide-based, sequential where-chain) reference."""
    org_shape = x.shape
    group = q_group_size if q_group_size > 0 else org_shape[-1]
    qx = x.reshape(-1, group).astype(jnp.float32)
    max_val = jnp.max(qx, axis=1, keepdims=True)
    min_val = jnp.min(qx, axis=1, keepdims=True)
    scale = jnp.maximum(jnp.abs(max_val), jnp.abs(min_val))
    q = qx / scale
    q = jnp.where(q >= _T0, _L_P1, q)
    q = jnp.where((q < _T0) & (q >= _T1), _L_P2, q)
    q = jnp.where((q < _T1) & (q >= _T2), _L_P3, q)
    q = jnp.where((q < _T2) & (q >= _T3), _L_P4, q)
    q = jnp.where((q < _T3) & (q >= _T4), _L_Z, q)
    q = jnp.where((q < _T4) & (q >= _T5), _L_N1, q)
    q = jnp.where((q < _T5) & (q >= _T6), _L_N2, q)
    q = jnp.where(q < _T6, _L_N3, q)
    return (q * scale).reshape(org_shape).astype(x.dtype)


if __name__ == "__main__":
    key = jax.random.PRNGKey(0)
    # Last dim = q_group_size (128) so the group reshape is valid.
    x = jax.random.normal(key, (2, 4, 8, 128), dtype=jnp.float32)

    y = jax.block_until_ready(ste_nf3_quantize(x, bit=3, q_group_size=128))
    y_ref = _reference_jax(x, q_group_size=128)

    assert y.shape == x.shape and y.dtype == x.dtype
    # reciprocal-then-multiply can differ from an exact divide by ~1 ulp in
    # the normalized value; only a sample sitting essentially exactly on an
    # NF3 threshold could flip bucket, so require >= 99.9% exact agreement.
    close = jnp.isclose(y, y_ref, atol=1e-6, rtol=1e-6)
    match_frac = float(jnp.mean(close.astype(jnp.float32)))
    assert match_frac > 0.999, match_frac

    # All-zero group: both the kernel and the reference propagate NaN
    # (divide-by-zero semantics of the original module).
    x0 = x.reshape(-1, 128).at[0].set(0.0).reshape(x.shape)
    y0 = jax.block_until_ready(ste_nf3_quantize(x0, bit=3, q_group_size=128))
    assert bool(jnp.all(jnp.isnan(y0.reshape(-1, 128)[0])))

    print("KERNEL_OK")
</pallas_src>

<mosaic_0001>
module attributes {stable_mosaic.version = 11 : i64} {
  func.func @_nf3_quant_kernel(%arg0: i32, %arg1: memref<32x128xf32, #tpu.memory_space<vmem>>, %arg2: memref<32x128xf32, #tpu.memory_space<vmem>>) attributes {dimension_semantics = [#tpu.dimension_semantics<parallel>], iteration_bounds = array<i64: 2>, scalar_prefetch = 0 : i64, scratch_operands = 0 : i64, tpu.core_type = #tpu.core_type<tc>, window_params = [{transform_indices = @transform_0, window_bounds = array<i64: 32, 128>}, {transform_indices = @transform_1, window_bounds = array<i64: 32, 128>}]} {
    %c0 = arith.constant 0 : index
    %c0_0 = arith.constant 0 : index
    %0 = vector.load %arg1[%c0, %c0_0] : memref<32x128xf32, #tpu.memory_space<vmem>>, vector<32x128xf32>
    %1 = math.absf %0 : vector<32x128xf32>
    %cst = arith.constant dense<0xFF800000> : vector<32xf32>
    %2 = vector.multi_reduction <maximumf>, %1, %cst [1] : vector<32x128xf32> to vector<32xf32>
    %3 = vector.shape_cast %2 : vector<32xf32> to vector<32x1xf32>
    %4 = tpu.reciprocal %3 : vector<32x1xf32> -> vector<32x1xf32>
    %5 = vector.broadcast %4 : vector<32x1xf32> to vector<32x128xf32>
    %6 = arith.mulf %0, %5 : vector<32x128xf32>
    %cst_1 = arith.constant 0.8114928 : f32
    %7 = vector.broadcast %cst_1 : f32 to vector<32x128xf32>
    %8 = arith.cmpf oge, %6, %7 : vector<32x128xf32>
    %cst_2 = arith.constant 0.502489805 : f32
    %9 = vector.broadcast %cst_2 : f32 to vector<32x128xf32>
    %10 = arith.cmpf oge, %6, %9 : vector<32x128xf32>
    %cst_3 = arith.constant 0.28266573 : f32
    %11 = vector.broadcast %cst_3 : f32 to vector<32x128xf32>
    %12 = arith.cmpf oge, %6, %11 : vector<32x128xf32>
    %cst_4 = arith.constant 0.0916687622 : f32
    %13 = vector.broadcast %cst_4 : f32 to vector<32x128xf32>
    %14 = arith.cmpf oge, %6, %13 : vector<32x128xf32>
    %cst_5 = arith.constant -0.123465702 : f32
    %15 = vector.broadcast %cst_5 : f32 to vector<32x128xf32>
    %16 = arith.cmpf oge, %6, %15 : vector<32x128xf32>
    %cst_6 = arith.constant -0.390977085 : f32
    %17 = vector.broadcast %cst_6 : f32 to vector<32x128xf32>
    %18 = arith.cmpf oge, %6, %17 : vector<32x128xf32>
    %cst_7 = arith.constant -0.767511368 : f32
    %19 = vector.broadcast %cst_7 : f32 to vector<32x128xf32>
    %20 = arith.cmpf oge, %6, %19 : vector<32x128xf32>
    %cst_8 = arith.constant -0.767511368 : f32
    %21 = vector.broadcast %cst_8 : f32 to vector<32x128xf32>
    %22 = arith.cmpf olt, %6, %21 : vector<32x128xf32>
    %cst_9 = arith.constant -1.000000e+00 : f32
    %23 = vector.broadcast %cst_9 : f32 to vector<32x128xf32>
    %24 = arith.select %22, %23, %6 : vector<32x128xi1>, vector<32x128xf32>
    %cst_10 = arith.constant -0.535022736 : f32
    %25 = vector.broadcast %cst_10 : f32 to vector<32x128xf32>
    %26 = arith.select %20, %25, %24 : vector<32x128xi1>, vector<32x128xf32>
    %cst_11 = arith.constant -0.246931404 : f32
    %27 = vector.broadcast %cst_11 : f32 to vector<32x128xf32>
    %28 = arith.select %18, %27, %26 : vector<32x128xi1>, vector<32x128xf32>
    %cst_12 = arith.constant 0.000000e+00 : f32
    %29 = vector.broadcast %cst_12 : f32 to vector<32x128xf32>
    %30 = arith.select %16, %29, %28 : vector<32x128xi1>, vector<32x128xf32>
    %cst_13 = arith.constant 0.183337525 : f32
    %31 = vector.broadcast %cst_13 : f32 to vector<32x128xf32>
    %32 = arith.select %14, %31, %30 : vector<32x128xi1>, vector<32x128xf32>
    %cst_14 = arith.constant 0.381993949 : f32
    %33 = vector.broadcast %cst_14 : f32 to vector<32x128xf32>
    %34 = arith.select %12, %33, %32 : vector<32x128xi1>, vector<32x128xf32>
    %cst_15 = arith.constant 0.622985661 : f32
    %35 = vector.broadcast %cst_15 : f32 to vector<32x128xf32>
    %36 = arith.select %10, %35, %34 : vector<32x128xi1>, vector<32x128xf32>
    %cst_16 = arith.constant 1.000000e+00 : f32
    %37 = vector.broadcast %cst_16 : f32 to vector<32x128xf32>
    %38 = arith.select %8, %37, %36 : vector<32x128xi1>, vector<32x128xf32>
    %39 = vector.broadcast %3 : vector<32x1xf32> to vector<32x128xf32>
    %40 = arith.mulf %38, %39 : vector<32x128xf32>
    %c0_17 = arith.constant 0 : index
    %c0_18 = arith.constant 0 : index
    %41 = vector.load %arg2[%c0_17, %c0_18] : memref<32x128xf32, #tpu.memory_space<vmem>>, vector<32x128xf32>
    tpu.vector_store %arg2[%c0_17, %c0_18], %40 {strides = array<i32>} : memref<32x128xf32, #tpu.memory_space<vmem>>, vector<32x128xf32>,
    return
  }
  func.func @transform_0(%arg0: i32) -> (i32, i32) {
    %c0_i32 = arith.constant 0 : i32
    %c0_i32_0 = arith.constant 0 : i32
    return %arg0, %c0_i32 : i32, i32
  }
  func.func @transform_1(%arg0: i32) -> (i32, i32) {
    %c0_i32 = arith.constant 0 : i32
    %c0_i32_0 = arith.constant 0 : i32
    return %arg0, %c0_i32 : i32, i32
  }
}

</mosaic_0001>

<llo_original>
// kernel: tpu_custom_call.1
$region0: #{tpu_custom_call.1}
  #allocation0 [shape = 'u32[]', space=smem, size = 0x4, offset = 0x4, fixed_abs, tag = 'smem constant byte address 0x4 - core index']
  #allocation1 [shape = 'u32[144,128]{1,0:T(1,128)}', space=vmem, size = 0x12000, scoped, tag = 'internal scratch']
  %s0 = inlined_call_operand.hbm [shape: f32[64,128], index: 0, kind: input, shape index: {}]
  %s1 = inlined_call_operand.hbm [shape: f32[64,128], index: 1, kind: output, shape index: {}]
  %s2 = sld [smem:[#allocation0]]
  $region41: #{tpu_custom_call.1} parent=0
    _
  %s4 = ssub.s32 1, %s2
  %s5 = scalar_select 0, %s4, %s2
  $region1: #{tpu_custom_call.1} parent=0
    #allocation2 [shape = 'u8[32768]{0}', space=vmem, size = 0x8000, scoped, tag = 'input window, operand 0']
    #allocation3 [shape = 's32[2]{0}', space=sflag, size = 0x8, scoped, tag = 'scoped memory for tpu_custom_call.1']
    #allocation4 [shape = 's32[2]{0}', space=sflag, size = 0x8, scoped, tag = 'scoped memory for tpu_custom_call.1']
    #allocation5 [shape = 'u8[32768]{0}', space=vmem, size = 0x8000, scoped, tag = 'output window, operand 0']
    %6 = vsyncpa [#allocation3], 0
    %s7 = scalar_lea.sflag [#allocation3], 1
    %8 = vsyncpa %s7, 0
    %9 = vsyncpa [#allocation4], 0
    %s10 = scalar_lea.sflag [#allocation4], 1
    %11 = vsyncpa %s10, 0
    loop: start=0, step=1, limit=4
    $region2: #{tpu_custom_call.1} parent=1 // loop_pre_header
      _
    $region3: #{tpu_custom_call.1} parent=1 // loop_header
      %s13 = sphi 0, %s17
      %p14 = scmp.ge.s32.totalorder %s13, 4
      %s23 = sphi 0, %s25
      %s26 = sphi 0, %s23
      %s27 = sphi 0, %s26
      %s43 = sphi 0, %s27
      %s49 = sphi 0, %s51
      %s52 = sphi 0, %s49
      %s53 = sphi 0, %s52
      %s69 = sphi 0, %s53
    $region4: #{tpu_custom_call.1} parent=1 // loop_header_branch
      %16 = sbr.rel (%p14) target = $region8
    $region5: #{tpu_custom_call.1} parent=1 // loop_body
      %s18 = ssub.s32 %s13, 1
      %s19 = ssub.s32 %s13, 2
      %s20 = sadd.s32 %s13, 1
      %s21 = ssub.s32 %s13, %s20
      %p22 = scmp.eq.s32.totalorder %s21, 0
      %s24 = sadd.s32 %s23, 1
      %s25 = scalar_select %p22, %s23, %s24
      %p28 = pneg %p22
      %p29 = scmp.eq.s32.totalorder %s13, 1
      %p30 = por %p28, %p29
      %p31 = scmp.ne.s32.totalorder %s23, %s26
      %p32 = scmp.eq.s32.totalorder %s13, 0
      %p33 = por %p31, %p32
      %p34 = scmp.ne.s32.totalorder %s23, %s26
      %p35 = scmp.eq.s32.totalorder %s18, 1
      %p36 = por %p34, %p35
      %p37 = scmp.ne.s32.totalorder %s26, %s27
      %p38 = scmp.eq.s32.totalorder %s18, 0
      %p39 = por %p37, %p38
      %p40 = scmp.ne.s32.totalorder %s26, %s27
      %p41 = scmp.eq.s32.totalorder %s19, 1
      %p42 = por %p40, %p41
      %p44 = scmp.ne.s32.totalorder %s27, %s43
      %p45 = scmp.eq.s32.totalorder %s19, 0
      %p46 = por %p44, %p45
      %s47 = ssub.s32 %s13, %s20
      %p48 = scmp.eq.s32.totalorder %s47, 0
      %s50 = sadd.s32 %s49, 1
      %s51 = scalar_select %p48, %s49, %s50
      %p54 = pneg %p48
      %p55 = scmp.eq.s32.totalorder %s13, 1
      %p56 = por %p54, %p55
      %p57 = scmp.ne.s32.totalorder %s49, %s52
      %p58 = scmp.eq.s32.totalorder %s13, 0
      %p59 = por %p57, %p58
      %p60 = scmp.ne.s32.totalorder %s49, %s52
      %p61 = scmp.eq.s32.totalorder %s18, 1
      %p62 = por %p60, %p61
      %p63 = scmp.ne.s32.totalorder %s52, %s53
      %p64 = scmp.eq.s32.totalorder %s18, 0
      %p65 = por %p63, %p64
      %p66 = scmp.ne.s32.totalorder %s52, %s53
      %p67 = scmp.eq.s32.totalorder %s19, 1
      %p68 = por %p66, %p67
      %p70 = scmp.ne.s32.totalorder %s53, %s69
      %p71 = scmp.eq.s32.totalorder %s19, 0
      %p72 = por %p70, %p71
      %p73 = scmp.le.s32.totalorder 1, %s13
      %p74 = scmp.lt.s32.totalorder %s13, 3
      %p75 = pnand %p73, %p74
      %p76 = pneg %p75
      // Predicated region
      $region9: #{tpu_custom_call.1} parent=5 // pred_check
        _
      $region10: #{tpu_custom_call.1} parent=5 // pred_check_branch
        %78 = sbr.rel (%p75) target = $region12
      $region11: #{tpu_custom_call.1} parent=5 // pred_region
        %s79 = ssub.s32 %s13, 1
      $region12: #{tpu_custom_call.1} parent=5 // pred_fallthru
        _
      %p80 = scmp.lt.s32.totalorder %s13, 2
      // Predicated region
      $region13: #{tpu_custom_call.1} parent=5 // pred_check
        %p81 = pneg %p80
      $region14: #{tpu_custom_call.1} parent=5 // pred_check_branch
        %83 = sbr.rel (%p81) target = $region16
      $region15: #{tpu_custom_call.1} parent=5 // pred_region
        // Predicated region
        $region17: #{tpu_custom_call.1} parent=15 // pred_check
          %p84 = pneg %p33
        $region18: #{tpu_custom_call.1} parent=15 // pred_check_branch
          %86 = sbr.rel (%p84) target = $region20
        $region19: #{tpu_custom_call.1} parent=15 // pred_region
          %s87 = sand.u32 %s23, 1
          %s88 = scalar_lea.sflag [#allocation3], %s87
          %s89 = sand.u32 %s23, 1
          %s90 = smul.addr %s89, 32
          %s91 = scalar_lea.vmem [#allocation2], %s90
          %s92 = smul.u32 4, %s13
          %s94 = ssub.s32 512, 512
          %95 = vsyncadd %s88, %s94
          %s96 = smul.addr %s92, 128
          %s97 = scalar_lea.hbm %s0, %s96
          %s98 = sshll.u32 %s91, 4
          %s99 = int_to_ptr.vmem [resolvable:$true] %s98
          %104 = dma.hbm_to_vmem [thread:$0]  %s97, 512, %s99, %s88, 128, 128, 8
        $region20: #{tpu_custom_call.1} parent=15 // pred_fallthru
          _
      $region16: #{tpu_custom_call.1} parent=5 // pred_fallthru
        _
      %p105 = scmp.le.s32.totalorder 1, %s13
      %p106 = scmp.lt.s32.totalorder %s13, 3
      %p107 = pnand %p105, %p106
      %p108 = pneg %p107
      // Predicated region
      $region21: #{tpu_custom_call.1} parent=5 // pred_check
        _
      $region22: #{tpu_custom_call.1} parent=5 // pred_check_branch
        %110 = sbr.rel (%p107) target = $region24
      $region23: #{tpu_custom_call.1} parent=5 // pred_region
        %s111 = ssub.s32 %s13, 1
        %s112 = sand.u32 %s26, 1
        %s113 = scalar_lea.sflag [#allocation3], %s112
        %s114 = sand.u32 %s26, 1
        %s115 = smul.addr %s114, 32
        %s116 = scalar_lea.vmem [#allocation2], %s115
        // Predicated region
        $region25: #{tpu_custom_call.1} parent=23 // pred_check
          %p117 = pneg %p39
        $region26: #{tpu_custom_call.1} parent=23 // pred_check_branch
          %119 = sbr.rel (%p117) target = $region28
        $region27: #{tpu_custom_call.1} parent=23 // pred_region
          %120 = dma.done %s113, 512
        $region28: #{tpu_custom_call.1} parent=23 // pred_fallthru
          _
        %s121 = sand.u32 %s26, 1
        %s122 = scalar_lea.sflag [#allocation3], %s121
        %s123 = sand.u32 %s26, 1
        %s124 = smul.addr %s123, 32
        %s125 = scalar_lea.vmem [#allocation2], %s124
        %p126 = pneg %p39
        %p127 = pneg %p36
        %p128 = pneg %p65
        %p129 = pneg %p62
        %s130 = sand.u32 %s52, 1
        %s131 = scalar_lea.sflag [#allocation4], %s130
        %s132 = sand.u32 %s52, 1
        %s133 = smul.addr %s132, 32
        %s134 = scalar_lea.vmem [#allocation5], %s133
        %s135 = smul.u32 4, %s18
        %s136 = smul.u32 4, %s18
        %v137 = vld [vmem:[%s116] sm:$0xff]
        %v138 = vld [vmem:[%s116 + $0x8] sm:$0xff]
        %v139 = vld [vmem:[%s116 + $0x10] sm:$0xff]
        %v140 = vld [vmem:[%s116 + $0x18] sm:$0xff]
        %v141 = vand.u32 2147483647, %v137
        %v142 = vand.u32 2147483647, %v138
        %v143 = vand.u32 2147483647, %v139
        %v144 = vand.u32 2147483647, %v140
        %145 = vmax.xlane.f32.xlu0 %v141
        %v146 = vpop.xlane.xlu0 %145
        %147 = vmax.xlane.f32.xlu0 %v142
        %v148 = vpop.xlane.xlu0 %147
        %149 = vmax.xlane.f32.xlu0 %v143
        %v150 = vpop.xlane.xlu0 %149
        %151 = vmax.xlane.f32.xlu0 %v144
        %v152 = vpop.xlane.xlu0 %151
        %v153 = vrcp.pop %v146
        %v154 = vrcp.pop %v148
        %v155 = vrcp.pop %v150
        %v156 = vrcp.pop %v152
        %v157 = vmul.f32 %v137, %v153
        %v158 = vmul.f32 %v138, %v154
        %v159 = vmul.f32 %v139, %v155
        %v160 = vmul.f32 %v140, %v156
        %vm161 = vcmp.ge.f32.partialorder %v157, 0.8114928
        %vm162 = vcmp.ge.f32.partialorder %v158, 0.8114928
        %vm163 = vcmp.ge.f32.partialorder %v159, 0.8114928
        %vm164 = vcmp.ge.f32.partialorder %v160, 0.8114928
        %vm165 = vcmp.ge.f32.partialorder %v157, 0.5024898
        %vm166 = vcmp.ge.f32.partialorder %v158, 0.5024898
        %vm167 = vcmp.ge.f32.partialorder %v159, 0.5024898
        %vm168 = vcmp.ge.f32.partialorder %v160, 0.5024898
        %vm169 = vcmp.ge.f32.partialorder %v157, 0.28266573
        %vm170 = vcmp.ge.f32.partialorder %v158, 0.28266573
        %vm171 = vcmp.ge.f32.partialorder %v159, 0.28266573
        %vm172 = vcmp.ge.f32.partialorder %v160, 0.28266573
        %vm173 = vcmp.ge.f32.partialorder %v157, 0.09166876
        %vm174 = vcmp.ge.f32.partialorder %v158, 0.09166876
        %vm175 = vcmp.ge.f32.partialorder %v159, 0.09166876
        %vm176 = vcmp.ge.f32.partialorder %v160, 0.09166876
        %vm177 = vcmp.ge.f32.partialorder %v157, -0.1234657
        %vm178 = vcmp.ge.f32.partialorder %v158, -0.1234657
        %vm179 = vcmp.ge.f32.partialorder %v159, -0.1234657
        %vm180 = vcmp.ge.f32.partialorder %v160, -0.1234657
        %vm181 = vcmp.ge.f32.partialorder %v157, -0.39097708
        %vm182 = vcmp.ge.f32.partialorder %v158, -0.39097708
        %vm183 = vcmp.ge.f32.partialorder %v159, -0.39097708
        %vm184 = vcmp.ge.f32.partialorder %v160, -0.39097708
        %vm185 = vcmp.ge.f32.partialorder %v157, -0.76751137
        %vm186 = vcmp.ge.f32.partialorder %v158, -0.76751137
        %vm187 = vcmp.ge.f32.partialorder %v159, -0.76751137
        %vm188 = vcmp.ge.f32.partialorder %v160, -0.76751137
        %vm189 = vcmp.lt.f32.partialorder %v157, -0.76751137
        %vm190 = vcmp.lt.f32.partialorder %v158, -0.76751137
        %vm191 = vcmp.lt.f32.partialorder %v159, -0.76751137
        %vm192 = vcmp.lt.f32.partialorder %v160, -0.76751137
        %v193 = vsel %vm189, -1.0, %v157
        %v194 = vsel %vm190, -1.0, %v158
        %v195 = vsel %vm191, -1.0, %v159
        %v196 = vsel %vm192, -1.0, %v160
        %v197 = vsel %vm185, -0.53502274, %v193
        %v198 = vsel %vm186, -0.53502274, %v194
        %v199 = vsel %vm187, -0.53502274, %v195
        %v200 = vsel %vm188, -0.53502274, %v196
        %v201 = vsel %vm181, -0.2469314, %v197
        %v202 = vsel %vm182, -0.2469314, %v198
        %v203 = vsel %vm183, -0.2469314, %v199
        %v204 = vsel %vm184, -0.2469314, %v200
        %v205 = vsel %vm177, 0.0, %v201
        %v206 = vsel %vm178, 0.0, %v202
        %v207 = vsel %vm179, 0.0, %v203
        %v208 = vsel %vm180, 0.0, %v204
        %v209 = vsel %vm173, 0.18333752, %v205
        %v210 = vsel %vm174, 0.18333752, %v206
        %v211 = vsel %vm175, 0.18333752, %v207
        %v212 = vsel %vm176, 0.18333752, %v208
        %v213 = vsel %vm169, 0.38199395, %v209
        %v214 = vsel %vm170, 0.38199395, %v210
        %v215 = vsel %vm171, 0.38199395, %v211
        %v216 = vsel %vm172, 0.38199395, %v212
        %v217 = vsel %vm165, 0.62298566, %v213
        %v218 = vsel %vm166, 0.62298566, %v214
        %v219 = vsel %vm167, 0.62298566, %v215
        %v220 = vsel %vm168, 0.62298566, %v216
        %v221 = vsel %vm161, 1.0, %v217
        %v222 = vsel %vm162, 1.0, %v218
        %v223 = vsel %vm163, 1.0, %v219
        %v224 = vsel %vm164, 1.0, %v220
        %v225 = vmul.f32 %v221, %v146
        %v226 = vmul.f32 %v222, %v148
        %v227 = vmul.f32 %v223, %v150
        %v228 = vmul.f32 %v224, %v152
        %229 = vst [vmem:[%s134] sm:$0xff] %v225
        %230 = vst [vmem:[%s134 + $0x8] sm:$0xff] %v226
        %231 = vst [vmem:[%s134 + $0x10] sm:$0xff] %v227
        %232 = vst [vmem:[%s134 + $0x18] sm:$0xff] %v228
        %s233 = sand.u32 %s52, 1
        %s234 = scalar_lea.sflag [#allocation4], %s233
        %s235 = sand.u32 %s52, 1
        %s236 = smul.addr %s235, 32
        %s237 = scalar_lea.vmem [#allocation5], %s236
        // Predicated region
        $region29: #{tpu_custom_call.1} parent=23 // pred_check
          %p238 = pneg %p62
        $region30: #{tpu_custom_call.1} parent=23 // pred_check_branch
          %240 = sbr.rel (%p238) target = $region32
        $region31: #{tpu_custom_call.1} parent=23 // pred_region
          %s241 = smul.u32 4, %s18
          %s243 = ssub.s32 512, 512
          %244 = vsyncadd %s234, %s243
          %s245 = smul.addr %s241, 128
          %s246 = scalar_lea.hbm %s1, %s245
          %s247 = sshll.u32 %s237, 4
          %s248 = int_to_ptr.vmem [resolvable:$true] %s247
          %253 = dma.vmem_to_hbm [thread:$0]  %s248, 512, %s246, %s234, 128, 128, 8
        $region32: #{tpu_custom_call.1} parent=23 // pred_fallthru
          _
      $region24: #{tpu_custom_call.1} parent=5 // pred_fallthru
        _
      %p254 = scmp.le.s32.totalorder 2, %s13
      // Predicated region
      $region33: #{tpu_custom_call.1} parent=5 // pred_check
        %p255 = pneg %p254
      $region34: #{tpu_custom_call.1} parent=5 // pred_check_branch
        %257 = sbr.rel (%p255) target = $region36
      $region35: #{tpu_custom_call.1} parent=5 // pred_region
        %s258 = ssub.s32 %s13, 2
        // Predicated region
        $region37: #{tpu_custom_call.1} parent=35 // pred_check
          %p259 = pneg %p68
        $region38: #{tpu_custom_call.1} parent=35 // pred_check_branch
          %261 = sbr.rel (%p259) target = $region40
        $region39: #{tpu_custom_call.1} parent=35 // pred_region
          %s262 = sand.u32 %s53, 1
          %s263 = scalar_lea.sflag [#allocation4], %s262
          %s264 = sand.u32 %s53, 1
          %s265 = smul.addr %s264, 32
          %s266 = scalar_lea.vmem [#allocation5], %s265
          %267 = dma.done %s263, 512
        $region40: #{tpu_custom_call.1} parent=35 // pred_fallthru
          _
      $region36: #{tpu_custom_call.1} parent=5 // pred_fallthru
        _
    $region6: #{tpu_custom_call.1} parent=1 // loop_footer
      %s17 = sadd.s32 1, %s13
    $region7: #{tpu_custom_call.1} parent=1 // loop_footer_branch
      %12 = sbr.rel target = $region3
    $region8: #{tpu_custom_call.1} parent=1 // loop_exit
      _
    %268 = vsyncpa [#allocation3], 1
    %s269 = scalar_lea.sflag [#allocation3], 1
    %270 = vsyncpa %s269, 1
    %271 = vsyncpa [#allocation4], 1
    %s272 = scalar_lea.sflag [#allocation4], 1
    %273 = vsyncpa %s272, 1

</llo_original>
